<compile_context>
chip_gen: v6e
topology: v6e:2x2x1
jax: 0.10.0
libtpu: 0.0.40
codegen_flags: <defaults>
</compile_context>

<pallas_src>
import functools

import numpy as np

import jax
import jax.numpy as jnp
from jax.experimental import pallas as pl
from jax.experimental.pallas import tpu as pltpu

# ---------------- config (stands in for `args`) ----------------
PIXID = 3          # args.obs_shape[0]  : conv input channels
PIXOD = 8          # args.hyper_hidden_dim : conv output channels
LID   = 6          # args.obs_shape[3]  : per-agent vector features (last_action=False)
RNN_H = 32         # args.rnn_hidden_dim
N_ACT = 5          # args.n_actions
FOV   = 5          # args.fov -> conv_str gives a single Conv2d(PIXID, PIXOD, k=3, s=1)
LOD   = 16         # fc1 output
ATTO  = 16         # attention hidden/output
K     = 3
OUT_S = (FOV - K) // 1 + 1            # 3
CNNOUT = OUT_S * OUT_S * PIXOD        # 72  (= size*size*pixod)
PIX_F = PIXID * FOV * FOV             # 75

# ---------------- derived layout of the packed weight slab ----------------
A_IN     = PIX_F + LID + RNN_H                # 113  used rows of block-diag GEMM A
A_IN_PAD = ((A_IN + 7) // 8) * 8              # 120
ACT_W    = CNNOUT + LOD + ATTO                # 104  relu'd part of GEMM A output
A_OUT    = ACT_W + 3 * RNN_H                  # 200  total GEMM A output cols
B_ROWS   = ACT_W                              # 104  rows of block-diag GEMM B
B_OUT    = 3 * RNN_H + ATTO                   # 112  GEMM B output cols
FC2_IN   = RNN_H + ATTO                       # 48
Q_PAD    = 8                                  # q lanes (5 used) in the output slab

ROW_A   = 0
ROW_B   = A_IN_PAD                            # 120
ROW_FC2 = ROW_B + B_ROWS                      # 224
ROW_BA  = ROW_FC2 + ((FC2_IN + 7) // 8) * 8   # 272  bias row for GEMM A (+ gh bias)
ROW_BB  = ROW_BA + 8                          # 280  bias row for GEMM B
ROW_BO  = ROW_BB + 8                          # 288  bias row for fc2
SLAB_R  = ROW_BO + 8                          # 296
SLAB_C  = 256
assert A_OUT <= SLAB_C and B_OUT <= 128 and FC2_IN <= 128


# -------------------- fused kernel (single grid step, all rows) --------------------
def fused_kernel(x_ref, h_ref, w_ref, out_ref, *, batch, n_agents):
    f32 = jnp.float32
    rows = batch * n_agents
    H = RNN_H

    x = x_ref[...]                                # (rows, PIX_F + LID + n_agents)
    h_prev = h_ref[...]                           # (rows, RNN_H)

    pixvec = x[:, :PIX_F + LID]                   # (rows, 81)  pixels | vec
    mat = x[:, PIX_F + LID:PIX_F + LID + n_agents]  # (rows, N) adjacency rows

    # ---- GEMM A: [pix | vec | h_prev | 0pad] @ blockdiag(conv, fc1|att1, W_hh) ----
    x_in = jnp.concatenate(
        [pixvec, h_prev, jnp.zeros((rows, A_IN_PAD - A_IN), f32)], axis=1)
    z1 = jnp.dot(x_in, w_ref[ROW_A:ROW_A + A_IN_PAD, :], preferred_element_type=f32)
    z1 = z1 + w_ref[ROW_BA:ROW_BA + 1, :]         # conv_b|fc1_b|att1_b|gru_b_hh
    act = jnp.maximum(z1[:, :ACT_W], 0.0)         # (rows, 104) = conv_feat | fc1 | a1
    gh = z1[:, ACT_W:ACT_W + 3 * H]               # (rows, 96)  GRU hidden gates

    # ---- GEMM B: [conv_feat | fc1 | a1] @ blockdiag(W_ih, att2) ----
    z2 = jnp.dot(act, w_ref[ROW_B:ROW_B + B_ROWS, 0:128], preferred_element_type=f32)
    z2 = z2 + w_ref[ROW_BB:ROW_BB + 1, 0:128]     # gru_b_ih | att2_b
    gi = z2[:, :3 * H]                            # (rows, 96)
    att = jnp.maximum(z2[:, 3 * H:3 * H + ATTO], 0.0)   # (rows, 16)

    # ---- PyTorch GRUCell (gate order r, z, n) ----
    r = jax.nn.sigmoid(gi[:, 0:H] + gh[:, 0:H])
    u = jax.nn.sigmoid(gi[:, H:2 * H] + gh[:, H:2 * H])
    n = jnp.tanh(gi[:, 2 * H:3 * H] + r * gh[:, 2 * H:3 * H])
    h_new = (1.0 - u) * n + u * h_prev            # (rows, RNN_H)

    # ---- per-batch bmm on the VPU: att_vec[b*N+i] = sum_j mat[b*N+i, j] * att[b*N+j] ----
    parts = []
    for b in range(batch):
        lo = b * n_agents
        att_b = att[lo:lo + n_agents, :]          # (N, ATTO)
        mat_b = mat[lo:lo + n_agents, :]          # (N, N)
        acc = mat_b[:, 0:1] * att_b[0:1, :]
        for j in range(1, n_agents):
            acc = acc + mat_b[:, j:j + 1] * att_b[j:j + 1, :]
        parts.append(acc)
    att_vec = parts[0] if batch == 1 else jnp.concatenate(parts, axis=0)  # (rows, ATTO)

    # ---- fc2 (lane-concat input, one matmul) + lane-dense output slab ----
    xo = jnp.concatenate([h_new, att_vec], axis=1)                         # (rows, 48)
    q = jnp.dot(xo, w_ref[ROW_FC2:ROW_FC2 + FC2_IN, 0:128],
                preferred_element_type=f32)
    q = q + w_ref[ROW_BO:ROW_BO + 1, 0:128]
    out_ref[...] = jnp.concatenate(
        [q[:, 0:Q_PAD], h_new, jnp.zeros((rows, 128 - Q_PAD - H), f32)], axis=1)


# ----------------------- parameters (PyTorch layout) -----------------------
def init_params(key):
    ks = jax.random.split(key, 16)

    def u(k, shape, scale=0.1):
        return jax.random.uniform(k, shape, jnp.float32, -scale, scale)

    return dict(
        conv_w=u(ks[0], (PIXOD, PIXID, K, K)),
        conv_b=u(ks[1], (PIXOD,)),
        fc1_w=u(ks[2], (LOD, LID)),
        fc1_b=u(ks[3], (LOD,)),
        gru_w_ih=u(ks[4], (3 * RNN_H, CNNOUT + LOD)),
        gru_b_ih=u(ks[5], (3 * RNN_H,)),
        gru_w_hh=u(ks[6], (3 * RNN_H, RNN_H)),
        gru_b_hh=u(ks[7], (3 * RNN_H,)),
        att1_w=u(ks[8], (ATTO, LID)),
        att1_b=u(ks[9], (ATTO,)),
        att2_w=u(ks[10], (ATTO, ATTO)),
        att2_b=u(ks[11], (ATTO,)),
        fc2_w=u(ks[12], (N_ACT, RNN_H + ATTO)),
        fc2_b=u(ks[13], (N_ACT,)),
    )


# --------- one-time parameter prep: fold conv + pack everything into ONE slab ---------
def prepare_params(p):
    # Fold the 3x3 VALID conv into a dense (75, 72) linear map whose output columns
    # already follow torch's (C, H, W) flatten order:
    #   out[c*9 + oh*3 + ow] += pix[cin*25 + (oh+kh)*5 + (ow+kw)] * w[c, cin, kh, kw]
    c, ci, kh, kw, oh, ow = np.meshgrid(
        np.arange(PIXOD), np.arange(PIXID), np.arange(K), np.arange(K),
        np.arange(OUT_S), np.arange(OUT_S), indexing='ij')
    in_idx = (ci * FOV * FOV + (oh + kh) * FOV + (ow + kw)).ravel()
    out_idx = (c * OUT_S * OUT_S + oh * OUT_S + ow).ravel()
    vals = p['conv_w'][c.ravel(), ci.ravel(), kh.ravel(), kw.ravel()]
    w_conv = jnp.zeros((PIX_F, CNNOUT), jnp.float32).at[in_idx, out_idx].set(vals)

    slab = jnp.zeros((SLAB_R, SLAB_C), jnp.float32)

    # GEMM A block-diagonal: rows [pix | vec | h_prev] -> cols [conv | fc1 | att1 | gh]
    slab = slab.at[0:PIX_F, 0:CNNOUT].set(w_conv)
    slab = slab.at[PIX_F:PIX_F + LID, CNNOUT:CNNOUT + LOD].set(p['fc1_w'].T)
    slab = slab.at[PIX_F:PIX_F + LID, CNNOUT + LOD:ACT_W].set(p['att1_w'].T)
    slab = slab.at[PIX_F + LID:A_IN, ACT_W:A_OUT].set(p['gru_w_hh'].T)

    # GEMM B block-diagonal: rows [conv | fc1 | att1] -> cols [gi | att2]
    slab = slab.at[ROW_B:ROW_B + CNNOUT + LOD, 0:3 * RNN_H].set(p['gru_w_ih'].T)
    slab = slab.at[ROW_B + CNNOUT + LOD:ROW_B + ACT_W, 3 * RNN_H:B_OUT].set(p['att2_w'].T)

    # fc2: rows [h_new | att_vec] -> cols [q]
    slab = slab.at[ROW_FC2:ROW_FC2 + FC2_IN, 0:N_ACT].set(p['fc2_w'].T)

    # bias rows (8-row aligned so the kernel's single-row slices are cheap)
    slab = slab.at[ROW_BA, 0:CNNOUT].set(jnp.repeat(p['conv_b'], OUT_S * OUT_S))
    slab = slab.at[ROW_BA, CNNOUT:CNNOUT + LOD].set(p['fc1_b'])
    slab = slab.at[ROW_BA, CNNOUT + LOD:ACT_W].set(p['att1_b'])
    slab = slab.at[ROW_BA, ACT_W:A_OUT].set(p['gru_b_hh'])
    slab = slab.at[ROW_BB, 0:3 * RNN_H].set(p['gru_b_ih'])
    slab = slab.at[ROW_BB, 3 * RNN_H:B_OUT].set(p['att2_b'])
    slab = slab.at[ROW_BO, 0:N_ACT].set(p['fc2_b'])
    return slab


# ----------------------------- forward -----------------------------
def crnn_att_fc1_forward(w_slab, inputs, hidden):
    B, N, FT = inputs.shape
    rows = B * N
    x2d = inputs.reshape(rows, FT)
    h2d = hidden.reshape(rows, RNN_H)

    kernel = functools.partial(fused_kernel, batch=B, n_agents=N)

    out = pl.pallas_call(
        kernel,
        grid=(1,),                                   # single step: rows are tiny
        in_specs=[
            pl.BlockSpec((rows, FT), lambda i: (0, 0)),
            pl.BlockSpec((rows, RNN_H), lambda i: (0, 0)),
            pl.BlockSpec((SLAB_R, SLAB_C), lambda i: (0, 0)),
        ],
        out_specs=pl.BlockSpec((rows, 128), lambda i: (0, 0)),
        out_shape=jax.ShapeDtypeStruct((rows, 128), jnp.float32),
        compiler_params=pltpu.CompilerParams(
            dimension_semantics=("arbitrary",)),     # too few rows to split across TCs
    )(x2d, h2d, w_slab)

    q = out[:, :N_ACT].reshape(B, N, N_ACT)
    h_new = out[:, Q_PAD:Q_PAD + RNN_H].reshape(B, N, RNN_H)
    return q, h_new


# ------------------- pure-JAX reference (for correctness) -------------------
def reference_forward(params, inputs, hidden):
    B, N, FT = inputs.shape
    feat = FT - N
    pix_vec = inputs[:, :, :feat]
    matrix = inputs[:, :, feat:]
    pix = pix_vec[:, :, :feat - LID].reshape(B * N, PIXID, FOV, FOV)
    vec = pix_vec[:, :, feat - LID:].reshape(B * N, LID)

    conv = jax.lax.conv_general_dilated(
        pix, params['conv_w'], window_strides=(1, 1), padding='VALID',
        dimension_numbers=('NCHW', 'OIHW', 'NCHW'))
    conv = jax.nn.relu(conv + params['conv_b'][None, :, None, None]).reshape(B * N, CNNOUT)

    fc1 = jax.nn.relu(vec @ params['fc1_w'].T + params['fc1_b'])
    hinput = jnp.concatenate([conv, fc1], axis=1)
    h_prev = hidden.reshape(B * N, RNN_H)
    gi = hinput @ params['gru_w_ih'].T + params['gru_b_ih']
    gh = h_prev @ params['gru_w_hh'].T + params['gru_b_hh']
    H = RNN_H
    r = jax.nn.sigmoid(gi[:, :H] + gh[:, :H])
    z = jax.nn.sigmoid(gi[:, H:2 * H] + gh[:, H:2 * H])
    n = jnp.tanh(gi[:, 2 * H:] + r * gh[:, 2 * H:])
    h_new = (1.0 - z) * n + z * h_prev

    a1 = jax.nn.relu(vec @ params['att1_w'].T + params['att1_b'])
    att = jax.nn.relu(a1 @ params['att2_w'].T + params['att2_b']).reshape(B, N, ATTO)
    att_vec = jnp.einsum('bij,bjo->bio', matrix, att)
    x = jnp.concatenate([h_new.reshape(B, N, RNN_H), att_vec], axis=-1)
    q = x @ params['fc2_w'].T + params['fc2_b']
    return q, h_new.reshape(B, N, RNN_H)


if __name__ == "__main__":
    key = jax.random.PRNGKey(0)
    kp, ki, kh = jax.random.split(key, 3)
    params = init_params(kp)
    w_slab = prepare_params(params)     # one-time: conv folding + block-diag packing

    B, N = 2, 4
    feat_total = PIX_F + LID + N        # 75 + 6 + 4 = 85
    inputs = jax.random.normal(ki, (B, N, feat_total), jnp.float32)
    hidden = jax.random.normal(kh, (B, N, RNN_H), jnp.float32)

    # pure-JAX reference (high precision) computed first
    with jax.default_matmul_precision("highest"):
        q_ref, h_ref = reference_forward(params, inputs, hidden)
        q_ref, h_ref = jax.block_until_ready((q_ref, h_ref))

    fwd = jax.jit(functools.partial(crnn_att_fc1_forward, w_slab))
    q, h_new = fwd(inputs, hidden)
    jax.block_until_ready((q, h_new))

    assert q.shape == (B, N, N_ACT)
    assert h_new.shape == (B, N, RNN_H)
    np.testing.assert_allclose(np.asarray(q), np.asarray(q_ref), rtol=2e-3, atol=2e-3)
    np.testing.assert_allclose(np.asarray(h_new), np.asarray(h_ref), rtol=2e-3, atol=2e-3)
    print("KERNEL_OK")
</pallas_src>

<mosaic_0001>
module attributes {stable_mosaic.version = 11 : i64} {
  func.func @fused_kernel(%arg0: i32, %arg1: memref<8x85xf32, #tpu.memory_space<vmem>>, %arg2: memref<8x32xf32, #tpu.memory_space<vmem>>, %arg3: memref<296x256xf32, #tpu.memory_space<vmem>>, %arg4: memref<8x128xf32, #tpu.memory_space<vmem>>) attributes {dimension_semantics = [#tpu.dimension_semantics<arbitrary>], iteration_bounds = array<i64: 1>, scalar_prefetch = 0 : i64, scratch_operands = 0 : i64, tpu.core_type = #tpu.core_type<tc>, window_params = [{pipeline_mode = #tpu.pipeline_mode<synchronous>, transform_indices = @transform_0, window_bounds = array<i64: 8, 85>}, {pipeline_mode = #tpu.pipeline_mode<synchronous>, transform_indices = @transform_1, window_bounds = array<i64: 8, 32>}, {pipeline_mode = #tpu.pipeline_mode<synchronous>, transform_indices = @transform_2, window_bounds = array<i64: 296, 256>}, {pipeline_mode = #tpu.pipeline_mode<synchronous>, transform_indices = @transform_3, window_bounds = array<i64: 8, 128>}]} {
    %c0 = arith.constant 0 : index
    %c0_0 = arith.constant 0 : index
    %0 = vector.load %arg1[%c0, %c0_0] : memref<8x85xf32, #tpu.memory_space<vmem>>, vector<8x85xf32>
    %c0_1 = arith.constant 0 : index
    %c0_2 = arith.constant 0 : index
    %1 = vector.load %arg2[%c0_1, %c0_2] : memref<8x32xf32, #tpu.memory_space<vmem>>, vector<8x32xf32>
    %2 = vector.extract_strided_slice %0 {offsets = [0, 0], sizes = [8, 81], strides = [1, 1]} : vector<8x85xf32> to vector<8x81xf32>
    %3 = vector.extract_strided_slice %0 {offsets = [0, 81], sizes = [8, 4], strides = [1, 1]} : vector<8x85xf32> to vector<8x4xf32>
    %cst = arith.constant 0.000000e+00 : f32
    %4 = vector.broadcast %cst : f32 to vector<8x7xf32>
    %5 = tpu.concatenate %2, %1, %4 in 1 : vector<8x81xf32>, vector<8x32xf32>, vector<8x7xf32> -> vector<8x120xf32>
    %c0_3 = arith.constant 0 : index
    %c0_4 = arith.constant 0 : index
    %6 = vector.load %arg3[%c0_3, %c0_4] : memref<296x256xf32, #tpu.memory_space<vmem>>, vector<120x256xf32>
    %cst_5 = arith.constant dense<0.000000e+00> : vector<8x256xf32>
    %7 = tpu.matmul %5, %6, %cst_5 {dimension_numbers = #tpu.dot_dimension_numbers<[1], [0], [0], [1], [0, 0, 1, 1], [], []>} : vector<8x120xf32>, vector<120x256xf32>, vector<8x256xf32> -> vector<8x256xf32>
    %c272 = arith.constant 272 : index
    %c0_6 = arith.constant 0 : index
    %8 = vector.load %arg3[%c272, %c0_6] : memref<296x256xf32, #tpu.memory_space<vmem>>, vector<1x256xf32>
    %9 = vector.broadcast %8 : vector<1x256xf32> to vector<8x256xf32>
    %10 = arith.addf %7, %9 : vector<8x256xf32>
    %11 = vector.extract_strided_slice %10 {offsets = [0, 0], sizes = [8, 104], strides = [1, 1]} : vector<8x256xf32> to vector<8x104xf32>
    %cst_7 = arith.constant 0.000000e+00 : f32
    %12 = vector.broadcast %cst_7 : f32 to vector<8x104xf32>
    %13 = arith.maximumf %11, %12 : vector<8x104xf32>
    %14 = vector.extract_strided_slice %10 {offsets = [0, 104], sizes = [8, 96], strides = [1, 1]} : vector<8x256xf32> to vector<8x96xf32>
    %c120 = arith.constant 120 : index
    %c0_8 = arith.constant 0 : index
    %15 = vector.load %arg3[%c120, %c0_8] : memref<296x256xf32, #tpu.memory_space<vmem>>, vector<104x128xf32>
    %cst_9 = arith.constant dense<0.000000e+00> : vector<8x128xf32>
    %16 = tpu.matmul %13, %15, %cst_9 {dimension_numbers = #tpu.dot_dimension_numbers<[1], [0], [0], [1], [0, 0, 1, 1], [], []>} : vector<8x104xf32>, vector<104x128xf32>, vector<8x128xf32> -> vector<8x128xf32>
    %c280 = arith.constant 280 : index
    %c0_10 = arith.constant 0 : index
    %17 = vector.load %arg3[%c280, %c0_10] : memref<296x256xf32, #tpu.memory_space<vmem>>, vector<1x128xf32>
    %18 = vector.broadcast %17 : vector<1x128xf32> to vector<8x128xf32>
    %19 = arith.addf %16, %18 : vector<8x128xf32>
    %20 = vector.extract_strided_slice %19 {offsets = [0, 0], sizes = [8, 96], strides = [1, 1]} : vector<8x128xf32> to vector<8x96xf32>
    %21 = vector.extract_strided_slice %19 {offsets = [0, 96], sizes = [8, 16], strides = [1, 1]} : vector<8x128xf32> to vector<8x16xf32>
    %cst_11 = arith.constant 0.000000e+00 : f32
    %22 = vector.broadcast %cst_11 : f32 to vector<8x16xf32>
    %23 = arith.maximumf %21, %22 : vector<8x16xf32>
    %24 = vector.extract_strided_slice %20 {offsets = [0, 0], sizes = [8, 32], strides = [1, 1]} : vector<8x96xf32> to vector<8x32xf32>
    %25 = vector.extract_strided_slice %14 {offsets = [0, 0], sizes = [8, 32], strides = [1, 1]} : vector<8x96xf32> to vector<8x32xf32>
    %26 = arith.addf %24, %25 : vector<8x32xf32>
    %27 = arith.negf %26 : vector<8x32xf32>
    %28 = math.exp %27 : vector<8x32xf32>
    %cst_12 = arith.constant 1.000000e+00 : f32
    %29 = vector.broadcast %cst_12 : f32 to vector<8x32xf32>
    %30 = arith.addf %29, %28 : vector<8x32xf32>
    %31 = arith.divf %29, %30 : vector<8x32xf32>
    %32 = vector.extract_strided_slice %20 {offsets = [0, 32], sizes = [8, 32], strides = [1, 1]} : vector<8x96xf32> to vector<8x32xf32>
    %33 = vector.extract_strided_slice %14 {offsets = [0, 32], sizes = [8, 32], strides = [1, 1]} : vector<8x96xf32> to vector<8x32xf32>
    %34 = arith.addf %32, %33 : vector<8x32xf32>
    %35 = arith.negf %34 : vector<8x32xf32>
    %36 = math.exp %35 : vector<8x32xf32>
    %cst_13 = arith.constant 1.000000e+00 : f32
    %37 = vector.broadcast %cst_13 : f32 to vector<8x32xf32>
    %38 = arith.addf %37, %36 : vector<8x32xf32>
    %39 = arith.divf %37, %38 : vector<8x32xf32>
    %40 = vector.extract_strided_slice %20 {offsets = [0, 64], sizes = [8, 32], strides = [1, 1]} : vector<8x96xf32> to vector<8x32xf32>
    %41 = vector.extract_strided_slice %14 {offsets = [0, 64], sizes = [8, 32], strides = [1, 1]} : vector<8x96xf32> to vector<8x32xf32>
    %42 = arith.mulf %31, %41 : vector<8x32xf32>
    %43 = arith.addf %40, %42 : vector<8x32xf32>
    %44 = math.tanh %43 : vector<8x32xf32>
    %cst_14 = arith.constant 1.000000e+00 : f32
    %45 = vector.broadcast %cst_14 : f32 to vector<8x32xf32>
    %46 = arith.subf %45, %39 : vector<8x32xf32>
    %47 = arith.mulf %46, %44 : vector<8x32xf32>
    %48 = arith.mulf %39, %1 : vector<8x32xf32>
    %49 = arith.addf %47, %48 : vector<8x32xf32>
    %50 = vector.extract_strided_slice %23 {offsets = [0, 0], sizes = [4, 16], strides = [1, 1]} : vector<8x16xf32> to vector<4x16xf32>
    %51 = vector.extract_strided_slice %3 {offsets = [0, 0], sizes = [4, 4], strides = [1, 1]} : vector<8x4xf32> to vector<4x4xf32>
    %52 = vector.extract_strided_slice %51 {offsets = [0, 0], sizes = [4, 1], strides = [1, 1]} : vector<4x4xf32> to vector<4x1xf32>
    %53 = vector.extract_strided_slice %50 {offsets = [0, 0], sizes = [1, 16], strides = [1, 1]} : vector<4x16xf32> to vector<1x16xf32>
    %54 = vector.broadcast %52 : vector<4x1xf32> to vector<4x16xf32>
    %55 = vector.broadcast %53 : vector<1x16xf32> to vector<4x16xf32>
    %56 = arith.mulf %54, %55 : vector<4x16xf32>
    %57 = vector.extract_strided_slice %51 {offsets = [0, 1], sizes = [4, 1], strides = [1, 1]} : vector<4x4xf32> to vector<4x1xf32>
    %58 = vector.extract_strided_slice %50 {offsets = [1, 0], sizes = [1, 16], strides = [1, 1]} : vector<4x16xf32> to vector<1x16xf32>
    %59 = vector.broadcast %57 : vector<4x1xf32> to vector<4x16xf32>
    %60 = vector.broadcast %58 : vector<1x16xf32> to vector<4x16xf32>
    %61 = arith.mulf %59, %60 : vector<4x16xf32>
    %62 = arith.addf %56, %61 : vector<4x16xf32>
    %63 = vector.extract_strided_slice %51 {offsets = [0, 2], sizes = [4, 1], strides = [1, 1]} : vector<4x4xf32> to vector<4x1xf32>
    %64 = vector.extract_strided_slice %50 {offsets = [2, 0], sizes = [1, 16], strides = [1, 1]} : vector<4x16xf32> to vector<1x16xf32>
    %65 = vector.broadcast %63 : vector<4x1xf32> to vector<4x16xf32>
    %66 = vector.broadcast %64 : vector<1x16xf32> to vector<4x16xf32>
    %67 = arith.mulf %65, %66 : vector<4x16xf32>
    %68 = arith.addf %62, %67 : vector<4x16xf32>
    %69 = vector.extract_strided_slice %51 {offsets = [0, 3], sizes = [4, 1], strides = [1, 1]} : vector<4x4xf32> to vector<4x1xf32>
    %70 = vector.extract_strided_slice %50 {offsets = [3, 0], sizes = [1, 16], strides = [1, 1]} : vector<4x16xf32> to vector<1x16xf32>
    %71 = vector.broadcast %69 : vector<4x1xf32> to vector<4x16xf32>
    %72 = vector.broadcast %70 : vector<1x16xf32> to vector<4x16xf32>
    %73 = arith.mulf %71, %72 : vector<4x16xf32>
    %74 = arith.addf %68, %73 : vector<4x16xf32>
    %75 = vector.extract_strided_slice %23 {offsets = [4, 0], sizes = [4, 16], strides = [1, 1]} : vector<8x16xf32> to vector<4x16xf32>
    %76 = vector.extract_strided_slice %3 {offsets = [4, 0], sizes = [4, 4], strides = [1, 1]} : vector<8x4xf32> to vector<4x4xf32>
    %77 = vector.extract_strided_slice %76 {offsets = [0, 0], sizes = [4, 1], strides = [1, 1]} : vector<4x4xf32> to vector<4x1xf32>
    %78 = vector.extract_strided_slice %75 {offsets = [0, 0], sizes = [1, 16], strides = [1, 1]} : vector<4x16xf32> to vector<1x16xf32>
    %79 = vector.broadcast %77 : vector<4x1xf32> to vector<4x16xf32>
    %80 = vector.broadcast %78 : vector<1x16xf32> to vector<4x16xf32>
    %81 = arith.mulf %79, %80 : vector<4x16xf32>
    %82 = vector.extract_strided_slice %76 {offsets = [0, 1], sizes = [4, 1], strides = [1, 1]} : vector<4x4xf32> to vector<4x1xf32>
    %83 = vector.extract_strided_slice %75 {offsets = [1, 0], sizes = [1, 16], strides = [1, 1]} : vector<4x16xf32> to vector<1x16xf32>
    %84 = vector.broadcast %82 : vector<4x1xf32> to vector<4x16xf32>
    %85 = vector.broadcast %83 : vector<1x16xf32> to vector<4x16xf32>
    %86 = arith.mulf %84, %85 : vector<4x16xf32>
    %87 = arith.addf %81, %86 : vector<4x16xf32>
    %88 = vector.extract_strided_slice %76 {offsets = [0, 2], sizes = [4, 1], strides = [1, 1]} : vector<4x4xf32> to vector<4x1xf32>
    %89 = vector.extract_strided_slice %75 {offsets = [2, 0], sizes = [1, 16], strides = [1, 1]} : vector<4x16xf32> to vector<1x16xf32>
    %90 = vector.broadcast %88 : vector<4x1xf32> to vector<4x16xf32>
    %91 = vector.broadcast %89 : vector<1x16xf32> to vector<4x16xf32>
    %92 = arith.mulf %90, %91 : vector<4x16xf32>
    %93 = arith.addf %87, %92 : vector<4x16xf32>
    %94 = vector.extract_strided_slice %76 {offsets = [0, 3], sizes = [4, 1], strides = [1, 1]} : vector<4x4xf32> to vector<4x1xf32>
    %95 = vector.extract_strided_slice %75 {offsets = [3, 0], sizes = [1, 16], strides = [1, 1]} : vector<4x16xf32> to vector<1x16xf32>
    %96 = vector.broadcast %94 : vector<4x1xf32> to vector<4x16xf32>
    %97 = vector.broadcast %95 : vector<1x16xf32> to vector<4x16xf32>
    %98 = arith.mulf %96, %97 : vector<4x16xf32>
    %99 = arith.addf %93, %98 : vector<4x16xf32>
    %100 = tpu.concatenate %74, %99 in 0 : vector<4x16xf32>, vector<4x16xf32> -> vector<8x16xf32>
    %101 = tpu.concatenate %49, %100 in 1 : vector<8x32xf32>, vector<8x16xf32> -> vector<8x48xf32>
    %c224 = arith.constant 224 : index
    %c0_15 = arith.constant 0 : index
    %102 = vector.load %arg3[%c224, %c0_15] : memref<296x256xf32, #tpu.memory_space<vmem>>, vector<48x128xf32>
    %cst_16 = arith.constant dense<0.000000e+00> : vector<8x128xf32>
    %103 = tpu.matmul %101, %102, %cst_16 {dimension_numbers = #tpu.dot_dimension_numbers<[1], [0], [0], [1], [0, 0, 1, 1], [], []>} : vector<8x48xf32>, vector<48x128xf32>, vector<8x128xf32> -> vector<8x128xf32>
    %c288 = arith.constant 288 : index
    %c0_17 = arith.constant 0 : index
    %104 = vector.load %arg3[%c288, %c0_17] : memref<296x256xf32, #tpu.memory_space<vmem>>, vector<1x128xf32>
    %105 = vector.broadcast %104 : vector<1x128xf32> to vector<8x128xf32>
    %106 = arith.addf %103, %105 : vector<8x128xf32>
    %107 = vector.extract_strided_slice %106 {offsets = [0, 0], sizes = [8, 8], strides = [1, 1]} : vector<8x128xf32> to vector<8x8xf32>
    %cst_18 = arith.constant 0.000000e+00 : f32
    %108 = vector.broadcast %cst_18 : f32 to vector<8x88xf32>
    %109 = tpu.concatenate %107, %49, %108 in 1 : vector<8x8xf32>, vector<8x32xf32>, vector<8x88xf32> -> vector<8x128xf32>
    %c0_19 = arith.constant 0 : index
    %c0_20 = arith.constant 0 : index
    %110 = vector.load %arg4[%c0_19, %c0_20] : memref<8x128xf32, #tpu.memory_space<vmem>>, vector<8x128xf32>
    tpu.vector_store %arg4[%c0_19, %c0_20], %109 {strides = array<i32>} : memref<8x128xf32, #tpu.memory_space<vmem>>, vector<8x128xf32>,
    return
  }
  func.func @transform_0(%arg0: i32) -> (i32, i32) {
    %c0_i32 = arith.constant 0 : i32
    %c0_i32_0 = arith.constant 0 : i32
    %c0_i32_1 = arith.constant 0 : i32
    return %c0_i32, %c0_i32_0 : i32, i32
  }
  func.func @transform_1(%arg0: i32) -> (i32, i32) {
    %c0_i32 = arith.constant 0 : i32
    %c0_i32_0 = arith.constant 0 : i32
    %c0_i32_1 = arith.constant 0 : i32
    return %c0_i32, %c0_i32_0 : i32, i32
  }
  func.func @transform_2(%arg0: i32) -> (i32, i32) {
    %c0_i32 = arith.constant 0 : i32
    %c0_i32_0 = arith.constant 0 : i32
    %c0_i32_1 = arith.constant 0 : i32
    return %c0_i32, %c0_i32_0 : i32, i32
  }
  func.func @transform_3(%arg0: i32) -> (i32, i32) {
    %c0_i32 = arith.constant 0 : i32
    %c0_i32_0 = arith.constant 0 : i32
    %c0_i32_1 = arith.constant 0 : i32
    return %c0_i32, %c0_i32_0 : i32, i32
  }
}

</mosaic_0001>

<llo_original>
// kernel: crnn_att_fc1_forward.1
$region0: #{crnn_att_fc1_forward.1}
  #allocation0 [shape = 'u32[]', space=smem, size = 0x4, offset = 0x4, fixed_abs, tag = 'smem constant byte address 0x4 - core index']
  #allocation1 [shape = 'u32[144,128]{1,0:T(1,128)}', space=vmem, size = 0x12000, scoped, tag = 'internal scratch']
  %s0 = inlined_call_operand.hbm [shape: f32[8,85], index: 0, kind: input, shape index: {}]
  %s1 = inlined_call_operand.hbm [shape: f32[8,32], index: 1, kind: input, shape index: {}]
  %s2 = inlined_call_operand.hbm [shape: f32[296,256], index: 2, kind: input, shape index: {}]
  %s3 = inlined_call_operand.vmem [shape: f32[8,128], index: 3, kind: output, shape index: {}]
  %s4 = sld [smem:[#allocation0]]
  $region34: #{crnn_att_fc1_forward.1} parent=0
    _
  %s6 = ssub.s32 1, %s4
  %s7 = scalar_select 0, %s6, %s4
  $region1: #{crnn_att_fc1_forward.1} parent=0
    #allocation2 [shape = 'u8[4096]{0}', space=vmem, size = 0x1000, scoped, tag = 'input window, operand 0, single buffered']
    #allocation3 [shape = 's32[1]{0}', space=sflag, size = 0x4, scoped, tag = 'scoped memory for crnn_att_fc1_forward.1']
    #allocation4 [shape = 'u8[4096]{0}', space=vmem, size = 0x1000, scoped, tag = 'input window, operand 1, single buffered']
    #allocation5 [shape = 's32[1]{0}', space=sflag, size = 0x4, scoped, tag = 'scoped memory for crnn_att_fc1_forward.1']
    #allocation6 [shape = 'u8[303104]{0}', space=vmem, size = 0x4a000, scoped, tag = 'input window, operand 2, single buffered']
    %8 = vsyncpa [#allocation3], 0
    %9 = vsyncpa [#allocation5], 0
    // Predicated region
    $region2: #{crnn_att_fc1_forward.1} parent=1 // pred_check
      _
    $region3: #{crnn_att_fc1_forward.1} parent=1 // pred_check_branch
      %11 = sbr.rel (0) target = $region5
    $region4: #{crnn_att_fc1_forward.1} parent=1 // pred_region
      %s13 = ssub.s32 128, 128
      %14 = vsyncadd [#allocation3], %s13
      %s16 = sshll.u32 [#allocation2], 4
      %s17 = int_to_ptr.vmem [resolvable:$true] %s16
      %19 = dma.hbm_to_vmem [thread:$0]  %s0, 128, %s17, [#allocation3]
    $region5: #{crnn_att_fc1_forward.1} parent=1 // pred_fallthru
      _
    // Predicated region
    $region6: #{crnn_att_fc1_forward.1} parent=1 // pred_check
      _
    $region7: #{crnn_att_fc1_forward.1} parent=1 // pred_check_branch
      %21 = sbr.rel (0) target = $region9
    $region8: #{crnn_att_fc1_forward.1} parent=1 // pred_region
      %s23 = ssub.s32 128, 128
      %24 = vsyncadd [#allocation5], %s23
      %s26 = sshll.u32 [#allocation4], 4
      %s27 = int_to_ptr.vmem [resolvable:$true] %s26
      %29 = dma.hbm_to_vmem [thread:$0]  %s1, 128, %s27, [#allocation5]
    $region9: #{crnn_att_fc1_forward.1} parent=1 // pred_fallthru
      _
    // Predicated region
    $region10: #{crnn_att_fc1_forward.1} parent=1 // pred_check
      _
    $region11: #{crnn_att_fc1_forward.1} parent=1 // pred_check_branch
      %31 = sbr.rel (0) target = $region13
    $region12: #{crnn_att_fc1_forward.1} parent=1 // pred_region
      %s33 = ssub.s32 9472, 9472
      %34 = vsyncadd [#allocation5], %s33
      %s35 = sshll.u32 [#allocation6], 4
      %s36 = int_to_ptr.vmem [resolvable:$true] %s35
      %41 = dma.hbm_to_vmem [thread:$0]  %s2, 9472, %s36, [#allocation5], 256, 256, 16
    $region13: #{crnn_att_fc1_forward.1} parent=1 // pred_fallthru
      _
    // Predicated region
    $region14: #{crnn_att_fc1_forward.1} parent=1 // pred_check
      _
    $region15: #{crnn_att_fc1_forward.1} parent=1 // pred_check_branch
      %43 = sbr.rel (0) target = $region17
    $region16: #{crnn_att_fc1_forward.1} parent=1 // pred_region
      %44 = dma.done [#allocation3], 128
    $region17: #{crnn_att_fc1_forward.1} parent=1 // pred_fallthru
      _
    // Predicated region
    $region18: #{crnn_att_fc1_forward.1} parent=1 // pred_check
      _
    $region19: #{crnn_att_fc1_forward.1} parent=1 // pred_check_branch
      %46 = sbr.rel (0) target = $region21
    $region20: #{crnn_att_fc1_forward.1} parent=1 // pred_region
      %47 = dma.done [#allocation5], 128
    $region21: #{crnn_att_fc1_forward.1} parent=1 // pred_fallthru
      _
    // Predicated region
    $region22: #{crnn_att_fc1_forward.1} parent=1 // pred_check
      _
    $region23: #{crnn_att_fc1_forward.1} parent=1 // pred_check_branch
      %49 = sbr.rel (0) target = $region25
    $region24: #{crnn_att_fc1_forward.1} parent=1 // pred_region
      %50 = dma.done [#allocation5], 9472
    $region25: #{crnn_att_fc1_forward.1} parent=1 // pred_fallthru
      _
    %v51 = vld [vmem:[#allocation2] sm:$0xff]
    %v52 = vld [vmem:[#allocation4] sm:$0xff]
    %54 = vrot.lane.b32.xlu0 %v52, 81
    %v55 = vpop.permute.xlu0 %54
    %vm57 = vcmask 662528
    %v58 = vsel %vm57, %v51, %v55
    %vm59 = vcmask 924672
    %v60 = vsel %vm59, %v58, 0.0
    %v61 = vld [vmem:[#allocation6] sm:$0xff]
    %v62 = vld [vmem:[#allocation6 + $0x8] sm:$0xff]
    %v63 = vld [vmem:[#allocation6 + $0x10] sm:$0xff]
    %v64 = vld [vmem:[#allocation6 + $0x18] sm:$0xff]
    %v65 = vld [vmem:[#allocation6 + $0x20] sm:$0xff]
    %v66 = vld [vmem:[#allocation6 + $0x28] sm:$0xff]
    %v67 = vld [vmem:[#allocation6 + $0x30] sm:$0xff]
    %v68 = vld [vmem:[#allocation6 + $0x38] sm:$0xff]
    %v69 = vld [vmem:[#allocation6 + $0x40] sm:$0xff]
    %v70 = vld [vmem:[#allocation6 + $0x48] sm:$0xff]
    %v71 = vld [vmem:[#allocation6 + $0x50] sm:$0xff]
    %v72 = vld [vmem:[#allocation6 + $0x58] sm:$0xff]
    %v73 = vld [vmem:[#allocation6 + $0x60] sm:$0xff]
    %v74 = vld [vmem:[#allocation6 + $0x68] sm:$0xff]
    %v75 = vld [vmem:[#allocation6 + $0x70] sm:$0xff]
    %v76 = vld [vmem:[#allocation6 + $0x78] sm:$0xff]
    %v77 = vld [vmem:[#allocation6 + $0x80] sm:$0xff]
    %v78 = vld [vmem:[#allocation6 + $0x88] sm:$0xff]
    %v79 = vld [vmem:[#allocation6 + $0x90] sm:$0xff]
    %v80 = vld [vmem:[#allocation6 + $0x98] sm:$0xff]
    %v81 = vld [vmem:[#allocation6 + $0xa0] sm:$0xff]
    %v82 = vld [vmem:[#allocation6 + $0xa8] sm:$0xff]
    %v83 = vld [vmem:[#allocation6 + $0xb0] sm:$0xff]
    %v84 = vld [vmem:[#allocation6 + $0xb8] sm:$0xff]
    %v85 = vld [vmem:[#allocation6 + $0xc0] sm:$0xff]
    %v86 = vld [vmem:[#allocation6 + $0xc8] sm:$0xff]
    %v87 = vld [vmem:[#allocation6 + $0xd0] sm:$0xff]
    %v88 = vld [vmem:[#allocation6 + $0xd8] sm:$0xff]
    %v89 = vld [vmem:[#allocation6 + $0xe0] sm:$0xff]
    %v90 = vld [vmem:[#allocation6 + $0xe8] sm:$0xff]
    %s91 = scalar_lea.vmem [#allocation6], 544
    %v92 = vld [vmem:[%s91] ss:$8 sm:$0x3]
    %v94 = vlaneseq
    %v95 = vshrl.u32 %v94, 7
    %v96 = vsub.s32 0, %v95
    %v97 = vrot.slane %v92, %v96
    %v98 = vlaneseq
    %v99 = vshrl.u32 %v98, 7
    %v100 = vsub.s32 1, %v99
    %v101 = vrot.slane %v92, %v100
    %vm104 = vcmask 982016
    %v106 = vsel %vm104, %v60, 0
    %108 = vmatprep.subr.mxu0 0.0
    %109 = vmatpush1.msra.mxu0 0.0
    %110 = vmatprep.subr.mxu0 %v90
    %111 = vmatpush1.msra.mxu0 %v89
    %112 = vmatprep.subr.mxu0 %v88
    %113 = vmatpush1.msra.mxu0 %v87
    %114 = vmatprep.subr.mxu0 %v86
    %115 = vmatpush1.msra.mxu0 %v85
    %116 = vmatprep.subr.mxu0 %v84
    %117 = vmatpush1.msra.mxu0 %v83
    %118 = vmatprep.subr.mxu0 %v82
    %119 = vmatpush1.msra.mxu0 %v81
    %120 = vmatprep.subr.mxu0 %v80
    %121 = vmatpush1.msra.mxu0 %v79
    %122 = vmatprep.subr.mxu0 %v78
    %123 = vmatpush1.msra.mxu0 %v77
    %124 = vmatprep.subr.mxu0 %v76
    %125 = vmatpush1.msra.mxu0 %v75
    %126 = vmatprep.subr.mxu0 %v74
    %127 = vmatpush1.msra.mxu0 %v73
    %128 = vmatprep.subr.mxu0 %v72
    %129 = vmatpush1.msra.mxu0 %v71
    %130 = vmatprep.subr.mxu0 %v70
    %131 = vmatpush1.msra.mxu0 %v69
    %132 = vmatprep.subr.mxu0 %v68
    %133 = vmatpush1.msra.mxu0 %v67
    %134 = vmatprep.subr.mxu0 %v66
    %135 = vmatpush1.msra.mxu0 %v65
    %136 = vmatprep.subr.mxu0 %v64
    %137 = vmatpush1.msra.mxu0 %v63
    %138 = vmatprep.subr.mxu0 %v62
    %139 = vmatpush1.msra.mxu0 %v61
    %140 = vmatprep.subr.mxu0 0.0
    %141 = vmatpush2.msra.mxu0 0.0
    %142 = vmatprep.subr.mxu0 0.0
    %143 = vmatpush2.msra.mxu0 0.0
    %144 = vmatprep.subr.mxu0 0.0
    %145 = vmatpush2.msra.mxu0 0.0
    %146 = vmatprep.subr.mxu0 0.0
    %147 = vmatpush2.msra.mxu0 0.0
    %148 = vmatprep.subr.mxu0 0.0
    %149 = vmatpush2.msra.mxu0 0.0
    %150 = vmatprep.subr.mxu0 0.0
    %151 = vmatpush2.msra.mxu0 0.0
    %152 = vmatprep.subr.mxu0 0.0
    %153 = vmatpush2.msra.mxu0 0.0
    %154 = vmatprep.subr.mxu0 0.0
    %155 = vmatpush2.msra.mxu0 0.0
    %156 = vmatprep.subr.mxu0 0.0
    %157 = vmatpush2.msra.mxu0 0.0
    %158 = vmatprep.subr.mxu0 0.0
    %159 = vmatpush2.msra.mxu0 0.0
    %160 = vmatprep.subr.mxu0 0.0
    %161 = vmatpush2.msra.mxu0 0.0
    %162 = vmatprep.subr.mxu0 0.0
    %163 = vmatpush2.msra.mxu0 0.0
    %164 = vmatprep.subr.mxu0 0.0
    %165 = vmatpush2.msra.mxu0 0.0
    %166 = vmatprep.subr.mxu0 0.0
    %167 = vmatpush2.msra.mxu0 0.0
    %168 = vmatprep.subr.mxu0 0.0
    %169 = vmatpush2.msra.mxu0 0.0
    %170 = vmatprep.subr.mxu0 0.0
    %171 = vmatpush2.msra.mxu0 0.0
    %172 = vmatprep.mubr.f32.mxu0 0.0
    %173 = vmatmul.mubr.f32.gmra.mxu0 %v106
    %v174 = vpop.f32.mrf.mxu0
    %v175 = vadd.f32 %v97, %v174
    %v176 = vpop.f32.mrf.mxu0
    %v177 = vadd.f32 %v101, %v176
    %178 = vdwg.mxu0
    %v179 = vmax.f32 %v175, 0.0
    %v180 = vld [vmem:[#allocation6 + $0xf0] sm:$0xff]
    %v181 = vld [vmem:[#allocation6 + $0x100] sm:$0xff]
    %v182 = vld [vmem:[#allocation6 + $0x110] sm:$0xff]
    %v183 = vld [vmem:[#allocation6 + $0x120] sm:$0xff]
    %v184 = vld [vmem:[#allocation6 + $0x130] sm:$0xff]
    %v185 = vld [vmem:[#allocation6 + $0x140] sm:$0xff]
    %v186 = vld [vmem:[#allocation6 + $0x150] sm:$0xff]
    %v187 = vld [vmem:[#allocation6 + $0x160] sm:$0xff]
    %v188 = vld [vmem:[#allocation6 + $0x170] sm:$0xff]
    %v189 = vld [vmem:[#allocation6 + $0x180] sm:$0xff]
    %v190 = vld [vmem:[#allocation6 + $0x190] sm:$0xff]
    %v191 = vld [vmem:[#allocation6 + $0x1a0] sm:$0xff]
    %v192 = vld [vmem:[#allocation6 + $0x1b0] sm:$0xff]
    %v193 = vld [vmem:[#allocation6 + $0x230] ss:$0 sm:$0xff]
    %vm194 = vcmask 850944
    %v196 = vsel %vm194, %v179, 0
    %198 = vmatprep.subr.mxu0 0.0
    %199 = vmatpush1.msra.mxu0 0.0
    %200 = vmatprep.subr.mxu0 0.0
    %201 = vmatpush1.msra.mxu0 0.0
    %202 = vmatprep.subr.mxu0 0.0
    %203 = vmatpush1.msra.mxu0 0.0
    %204 = vmatprep.subr.mxu0 0.0
    %205 = vmatpush1.msra.mxu0 %v192
    %206 = vmatprep.subr.mxu0 0.0
    %207 = vmatpush1.msra.mxu0 %v191
    %208 = vmatprep.subr.mxu0 0.0
    %209 = vmatpush1.msra.mxu0 %v190
    %210 = vmatprep.subr.mxu0 0.0
    %211 = vmatpush1.msra.mxu0 %v189
    %212 = vmatprep.subr.mxu0 0.0
    %213 = vmatpush1.msra.mxu0 %v188
    %214 = vmatprep.subr.mxu0 0.0
    %215 = vmatpush1.msra.mxu0 %v187
    %216 = vmatprep.subr.mxu0 0.0
    %217 = vmatpush1.msra.mxu0 %v186
    %218 = vmatprep.subr.mxu0 0.0
    %219 = vmatpush1.msra.mxu0 %v185
    %220 = vmatprep.subr.mxu0 0.0
    %221 = vmatpush1.msra.mxu0 %v184
    %222 = vmatprep.subr.mxu0 0.0
    %223 = vmatpush1.msra.mxu0 %v183
    %224 = vmatprep.subr.mxu0 0.0
    %225 = vmatpush1.msra.mxu0 %v182
    %226 = vmatprep.subr.mxu0 0.0
    %227 = vmatpush1.msra.mxu0 %v181
    %228 = vmatprep.subr.mxu0 0.0
    %229 = vmatpush1.msra.mxu0 %v180
    %230 = vmatprep.subr.mxu0 0.0
    %231 = vmatpush2.msra.mxu0 0.0
    %232 = vmatprep.subr.mxu0 0.0
    %233 = vmatpush2.msra.mxu0 0.0
    %234 = vmatprep.subr.mxu0 0.0
    %235 = vmatpush2.msra.mxu0 0.0
    %236 = vmatprep.subr.mxu0 0.0
    %237 = vmatpush2.msra.mxu0 0.0
    %238 = vmatprep.subr.mxu0 0.0
    %239 = vmatpush2.msra.mxu0 0.0
    %240 = vmatprep.subr.mxu0 0.0
    %241 = vmatpush2.msra.mxu0 0.0
    %242 = vmatprep.subr.mxu0 0.0
    %243 = vmatpush2.msra.mxu0 0.0
    %244 = vmatprep.subr.mxu0 0.0
    %245 = vmatpush2.msra.mxu0 0.0
    %246 = vmatprep.subr.mxu0 0.0
    %247 = vmatpush2.msra.mxu0 0.0
    %248 = vmatprep.subr.mxu0 0.0
    %249 = vmatpush2.msra.mxu0 0.0
    %250 = vmatprep.subr.mxu0 0.0
    %251 = vmatpush2.msra.mxu0 0.0
    %252 = vmatprep.subr.mxu0 0.0
    %253 = vmatpush2.msra.mxu0 0.0
    %254 = vmatprep.subr.mxu0 0.0
    %255 = vmatpush2.msra.mxu0 0.0
    %256 = vmatprep.subr.mxu0 0.0
    %257 = vmatpush2.msra.mxu0 0.0
    %258 = vmatprep.subr.mxu0 0.0
    %259 = vmatpush2.msra.mxu0 0.0
    %260 = vmatprep.subr.mxu0 0.0
    %261 = vmatpush2.msra.mxu0 0.0
    %262 = vmatprep.mubr.f32.mxu0 0.0
    %263 = vmatmul.mubr.f32.gmra.mxu0 %v196
    %v264 = vpop.f32.mrf.mxu0
    %v265 = vadd.f32 %v193, %v264
    %v266 = vpop.f32.mrf.mxu0
    %267 = vdwg.mxu0
    %v268 = vmax.f32 %v265, 0.0
    %271 = vrot.lane.b32.xlu0 %v175, 24
    %v272 = vpop.permute.xlu0 %271
    %273 = vrot.lane.b32.xlu0 %v177, 24
    %v274 = vpop.permute.xlu0 %273
    %vm275 = vcmask 195584
    %v276 = vsel %vm275, %v272, %v274
    %v278 = vadd.f32 %v265, %v276
    %v279 = vxor.u32 %v278, 2147483648
    %v280 = vmul.f32 %v279, 1.442695
    %v281 = vpow.pop %v280
    %v282 = vadd.f32 %v281, 1.0
    %v283 = vrcp.pop %v282
    %v284 = vmul.f32 1.0, %v283
    %v286 = vadd.f32 %v265, %v274
    %v287 = vxor.u32 %v286, 2147483648
    %v288 = vmul.f32 %v287, 1.442695
    %v289 = vpow.pop %v288
    %v290 = vadd.f32 %v289, 1.0
    %v291 = vrcp.pop %v290
    %v292 = vmul.f32 1.0, %v291
    %293 = vrot.lane.b32.xlu0 %v177, 88
    %v294 = vpop.permute.xlu0 %293
    %v296 = vmul.f32 %v284, %v294
    %298 = vrot.lane.b32.xlu0 %v296, 64
    %v299 = vpop.permute.xlu0 %298
    %v301 = vadd.f32 %v265, %v299
    %v302 = vtanh.pop %v301
    %v303 = vsub.f32 1.0, %v292
    %305 = vrot.lane.b32.xlu0 %v302, 96
    %v306 = vpop.permute.xlu0 %305
    %v308 = vmul.f32 %v303, %v306
    %309 = vrot.lane.b32.xlu0 %v52, 32
    %v310 = vpop.permute.xlu0 %309
    %v312 = vmul.f32 %v292, %v310
    %v313 = vadd.f32 %v308, %v312
    %315 = vset.pattern.permute.xlu0 81
    %316 = vperm.xlu0 %315, %v51
    %v317 = vpop.permute.xlu0 %316
    %v319 = vlaneseq
    %v320 = vshrl.u32 %v319, 7
    %v321 = vsub.s32 0, %v320
    %v322 = vrot.slane %v268, %v321
    %v323 = vmul.f32 %v317, %v322
    %324 = vset.pattern.permute.xlu0 82
    %325 = vperm.xlu0 %324, %v51
    %v326 = vpop.permute.xlu0 %325
    %v328 = vlaneseq
    %v329 = vshrl.u32 %v328, 7
    %v330 = vsub.s32 1, %v329
    %v331 = vrot.slane %v268, %v330
    %v332 = vmul.f32 %v326, %v331
    %v333 = vadd.f32 %v323, %v332
    %334 = vset.pattern.permute.xlu0 83
    %335 = vperm.xlu0 %334, %v51
    %v336 = vpop.permute.xlu0 %335
    %v338 = vlaneseq
    %v339 = vshrl.u32 %v338, 7
    %v340 = vsub.s32 2, %v339
    %v341 = vrot.slane %v268, %v340
    %v342 = vmul.f32 %v336, %v341
    %v343 = vadd.f32 %v333, %v342
    %344 = vset.pattern.permute.xlu0 84
    %345 = vperm.xlu0 %344, %v51
    %v346 = vpop.permute.xlu0 %345
    %v348 = vlaneseq
    %v349 = vshrl.u32 %v348, 7
    %v350 = vsub.s32 3, %v349
    %v351 = vrot.slane %v268, %v350
    %v352 = vmul.f32 %v346, %v351
    %v353 = vadd.f32 %v343, %v352
    %v354 = vlaneseq
    %v355 = vshrl.u32 %v354, 7
    %v356 = vsub.s32 4, %v355
    %v357 = vrot.slane %v268, %v356
    %v358 = vmul.f32 %v317, %v357
    %v359 = vlaneseq
    %v360 = vshrl.u32 %v359, 7
    %v361 = vsub.s32 5, %v360
    %v362 = vrot.slane %v268, %v361
    %v363 = vmul.f32 %v326, %v362
    %v364 = vadd.f32 %v358, %v363
    %v365 = vlaneseq
    %v366 = vshrl.u32 %v365, 7
    %v367 = vsub.s32 6, %v366
    %v368 = vrot.slane %v268, %v367
    %v369 = vmul.f32 %v336, %v368
    %v370 = vadd.f32 %v364, %v369
    %v371 = vlaneseq
    %v372 = vshrl.u32 %v371, 7
    %v373 = vsub.s32 7, %v372
    %v374 = vrot.slane %v268, %v373
    %v375 = vmul.f32 %v346, %v374
    %v376 = vadd.f32 %v370, %v375
    %vm377 = vcmask 1043456
    %v378 = vsel %vm377, %v353, %v376
    %380 = vrot.lane.b32.xlu0 %v313, 96
    %v381 = vpop.permute.xlu0 %380
    %384 = vrot.lane.b32.xlu0 %v378, 64
    %v385 = vpop.permute.xlu0 %384
    %vm387 = vcmask 261120
    %v388 = vsel %vm387, %v381, %v385
    %v389 = vld [vmem:[#allocation6 + $0x1c0] sm:$0xff]
    %v390 = vld [vmem:[#allocation6 + $0x1d0] sm:$0xff]
    %v391 = vld [vmem:[#allocation6 + $0x1e0] sm:$0xff]
    %v392 = vld [vmem:[#allocation6 + $0x1f0] sm:$0xff]
    %v393 = vld [vmem:[#allocation6 + $0x200] sm:$0xff]
    %v394 = vld [vmem:[#allocation6 + $0x210] sm:$0xff]
    %v395 = vld [vmem:[#allocation6 + $0x240] ss:$0 sm:$0xff]
    %vm396 = vcmask 392192
    %v398 = vsel %vm396, %v388, 0
    %400 = vmatprep.subr.mxu0 0.0
    %401 = vmatpush1.msra.mxu0 0.0
    %402 = vmatprep.subr.mxu0 0.0
    %403 = vmatpush1.msra.mxu0 0.0
    %404 = vmatprep.subr.mxu0 0.0
    %405 = vmatpush1.msra.mxu0 0.0
    %406 = vmatprep.subr.mxu0 0.0
    %407 = vmatpush1.msra.mxu0 0.0
    %408 = vmatprep.subr.mxu0 0.0
    %409 = vmatpush1.msra.mxu0 0.0
    %410 = vmatprep.subr.mxu0 0.0
    %411 = vmatpush1.msra.mxu0 0.0
    %412 = vmatprep.subr.mxu0 0.0
    %413 = vmatpush1.msra.mxu0 0.0
    %414 = vmatprep.subr.mxu0 0.0
    %415 = vmatpush1.msra.mxu0 0.0
    %416 = vmatprep.subr.mxu0 0.0
    %417 = vmatpush1.msra.mxu0 0.0
    %418 = vmatprep.subr.mxu0 0.0
    %419 = vmatpush1.msra.mxu0 0.0
    %420 = vmatprep.subr.mxu0 0.0
    %421 = vmatpush1.msra.mxu0 %v394
    %422 = vmatprep.subr.mxu0 0.0
    %423 = vmatpush1.msra.mxu0 %v393
    %424 = vmatprep.subr.mxu0 0.0
    %425 = vmatpush1.msra.mxu0 %v392
    %426 = vmatprep.subr.mxu0 0.0
    %427 = vmatpush1.msra.mxu0 %v391
    %428 = vmatprep.subr.mxu0 0.0
    %429 = vmatpush1.msra.mxu0 %v390
    %430 = vmatprep.subr.mxu0 0.0
    %431 = vmatpush1.msra.mxu0 %v389
    %432 = vmatprep.subr.mxu0 0.0
    %433 = vmatpush2.msra.mxu0 0.0
    %434 = vmatprep.subr.mxu0 0.0
    %435 = vmatpush2.msra.mxu0 0.0
    %436 = vmatprep.subr.mxu0 0.0
    %437 = vmatpush2.msra.mxu0 0.0
    %438 = vmatprep.subr.mxu0 0.0
    %439 = vmatpush2.msra.mxu0 0.0
    %440 = vmatprep.subr.mxu0 0.0
    %441 = vmatpush2.msra.mxu0 0.0
    %442 = vmatprep.subr.mxu0 0.0
    %443 = vmatpush2.msra.mxu0 0.0
    %444 = vmatprep.subr.mxu0 0.0
    %445 = vmatpush2.msra.mxu0 0.0
    %446 = vmatprep.subr.mxu0 0.0
    %447 = vmatpush2.msra.mxu0 0.0
    %448 = vmatprep.subr.mxu0 0.0
    %449 = vmatpush2.msra.mxu0 0.0
    %450 = vmatprep.subr.mxu0 0.0
    %451 = vmatpush2.msra.mxu0 0.0
    %452 = vmatprep.subr.mxu0 0.0
    %453 = vmatpush2.msra.mxu0 0.0
    %454 = vmatprep.subr.mxu0 0.0
    %455 = vmatpush2.msra.mxu0 0.0
    %456 = vmatprep.subr.mxu0 0.0
    %457 = vmatpush2.msra.mxu0 0.0
    %458 = vmatprep.subr.mxu0 0.0
    %459 = vmatpush2.msra.mxu0 0.0
    %460 = vmatprep.subr.mxu0 0.0
    %461 = vmatpush2.msra.mxu0 0.0
    %462 = vmatprep.subr.mxu0 0.0
    %463 = vmatpush2.msra.mxu0 0.0
    %464 = vmatprep.mubr.f32.mxu0 0.0
    %465 = vmatmul.mubr.f32.gmra.mxu0 %v398
    %v466 = vpop.f32.mrf.mxu0
    %v467 = vadd.f32 %v395, %v466
    %v468 = vpop.f32.mrf.mxu0
    %469 = vdwg.mxu0
    %470 = vrot.lane.b32.xlu0 %v313, 104
    %v471 = vpop.permute.xlu0 %470
    %vm473 = vcmask 64512
    %v474 = vsel %vm473, %v467, %v471
    %vm475 = vcmask 326656
    %v476 = vsel %vm475, %v474, 0.0
    %477 = vst [vmem:[%s3] sm:$0xff] %v476
    // Predicated region
    $region26: #{crnn_att_fc1_forward.1} parent=1 // pred_check
      _
    $region27: #{crnn_att_fc1_forward.1} parent=1 // pred_check_branch
      %479 = sbr.rel (0) target = $region29
    $region28: #{crnn_att_fc1_forward.1} parent=1 // pred_region
      _
    $region29: #{crnn_att_fc1_forward.1} parent=1 // pred_fallthru
      _
    // Predicated region
    $region30: #{crnn_att_fc1_forward.1} parent=1 // pred_check
      _
    $region31: #{crnn_att_fc1_forward.1} parent=1 // pred_check_branch
      %481 = sbr.rel (0) target = $region33
    $region32: #{crnn_att_fc1_forward.1} parent=1 // pred_region
      _
    $region33: #{crnn_att_fc1_forward.1} parent=1 // pred_fallthru
      _
    %482 = vsyncpa [#allocation3], 1
    %483 = vsyncpa [#allocation5], 1

</llo_original>
